<compile_context>
chip_gen: v7x
topology: tpu7x:2x2x1
jax: 0.10.0
libtpu: 0.0.40
codegen_flags: <defaults>
</compile_context>

<pallas_src>
import functools
import math

import jax
import jax.numpy as jnp
from jax import lax
from jax.experimental import pallas as pl
from jax.experimental.pallas import tpu as pltpu


# ----------------------------------------------------------------- utilities


def _vmem_limit_bytes():
    """Per-generation VMEM budget: v7x has 64 MiB physical, v5e/v6e have 128 MiB."""
    try:
        kind = jax.devices()[0].device_kind.lower()
    except Exception:
        kind = ""
    if "v7" in kind:
        return 48 * 1024 * 1024
    return 96 * 1024 * 1024


def _sublane(dtype):
    itemsize = jnp.dtype(dtype).itemsize
    return max(8, 32 // max(itemsize, 1))        # 8 f32, 16 bf16, 32 int8/fp8


def _round_up(n, m):
    return -(-n // m) * m


def _pick_tm(M, D, dtype, live_tiles, vmem_limit, reserved_bytes=0):
    """VMEM-budget- and dtype-aware row tile.

    `live_tiles` counts the number of (tm, D)-sized buffers alive at once
    (inputs + outputs, double-buffered).  Partial last blocks are fine, so tm
    does not need to divide M (Pallas masks the boundary)."""
    itemsize = jnp.dtype(dtype).itemsize
    sub = _sublane(dtype)
    row_bytes = D * itemsize
    budget = max((2 * vmem_limit) // 3 - reserved_bytes,
                 live_tiles * sub * row_bytes)
    tm = int(budget // (live_tiles * row_bytes))
    tm = max(sub, (tm // sub) * sub)
    tm = min(tm, 2048)
    # Keep the row grid >= ~4 steps when M allows so software pipelining works
    # and v7x megacore can shard the 'parallel' row axis across both TCs.
    if M >= 4 * sub:
        tm = min(tm, _round_up(-(-M // 4), sub))
    else:
        tm = min(tm, _round_up(M, sub))
    return tm


def _dropout_threshold(p):
    return min(int(round(float(p) * 2 ** 32)), 2 ** 32 - 1)


# ------------------------------------------------------------------ kernels


def _layernorm_kernel(x_ref, g_ref, b_ref, o_ref, *, eps):
    """y = (x - mean) * rsqrt(var + eps) * g + b, one-pass stats, FMA form."""
    x = x_ref[...].astype(jnp.float32)                 # (tm, D)
    n = x.shape[-1]
    s1 = jnp.sum(x, axis=-1, keepdims=True)
    s2 = jnp.sum(x * x, axis=-1, keepdims=True)        # reductions overlap on XLU
    mean = s1 * (1.0 / n)
    var = s2 * (1.0 / n) - mean * mean                 # biased, like nn.LayerNorm
    inv = lax.rsqrt(var + eps)                         # EUP slot
    scale = inv * g_ref[...].astype(jnp.float32)
    shift = b_ref[...].astype(jnp.float32) - mean * scale
    o_ref[...] = (x * scale + shift).astype(o_ref.dtype)


def _dropout_residual_kernel(*refs, threshold, inv_keep, add_residual, has_bits):
    """out = x + dropout(y)  (or just dropout(y)); native-dtype math."""
    if has_bits:
        x_ref, y_ref, bits_ref, o_ref = refs
    else:
        x_ref, y_ref, o_ref = refs
    y = y_ref[...]
    if has_bits:
        keep = bits_ref[...] >= jnp.uint32(threshold)  # integer compare, no cvt
        y = jnp.where(keep, y * jnp.asarray(inv_keep, y.dtype), jnp.zeros_like(y))
    if add_residual:
        y = x_ref[...] + y
    o_ref[...] = y.astype(o_ref.dtype)


def _fused_ln_sublayer_kernel(*refs, eps, threshold, inv_keep, add_residual,
                              has_bits, activation):
    """LN -> (y @ W + b) -> activation -> dropout -> (+x), all in one kernel."""
    if has_bits:
        x_ref, g_ref, b_ref, w_ref, wb_ref, bits_ref, o_ref = refs
    else:
        x_ref, g_ref, b_ref, w_ref, wb_ref, o_ref = refs
    x = x_ref[...].astype(jnp.float32)                 # (tm, D)
    n = x.shape[-1]
    s1 = jnp.sum(x, axis=-1, keepdims=True)
    s2 = jnp.sum(x * x, axis=-1, keepdims=True)
    mean = s1 * (1.0 / n)
    var = s2 * (1.0 / n) - mean * mean
    inv = lax.rsqrt(var + eps)
    scale = inv * g_ref[...].astype(jnp.float32)
    shift = b_ref[...].astype(jnp.float32) - mean * scale
    y = x * scale + shift                              # stays in VMEM, no HBM pass
    h = jnp.dot(y.astype(w_ref.dtype), w_ref[...],
                preferred_element_type=jnp.float32,
                precision=lax.Precision.HIGHEST)       # MXU
    h = h + wb_ref[...].astype(jnp.float32)
    if activation is not None:
        h = activation(h)                              # EUP (tanh etc.)
    h = h.astype(o_ref.dtype)
    if has_bits:
        keep = bits_ref[...] >= jnp.uint32(threshold)
        h = jnp.where(keep, h * jnp.asarray(inv_keep, h.dtype), jnp.zeros_like(h))
    if add_residual:
        h = x_ref[...] + h
    o_ref[...] = h


# ------------------------------------------------------------------ wrappers


def _layernorm_2d(x2d, gamma, beta, *, eps, vmem_limit):
    M, D = x2d.shape
    itemsize = jnp.dtype(x2d.dtype).itemsize
    tm = _pick_tm(M, D, x2d.dtype, live_tiles=4, vmem_limit=vmem_limit)
    grid = (pl.cdiv(M, tm),)
    g2d = gamma.reshape(1, D)
    b2d = beta.reshape(1, D)
    cost = pl.CostEstimate(flops=8 * M * D, transcendentals=M,
                           bytes_accessed=itemsize * (2 * M * D + 2 * D))
    return pl.pallas_call(
        functools.partial(_layernorm_kernel, eps=float(eps)),
        out_shape=jax.ShapeDtypeStruct((M, D), x2d.dtype),
        grid_spec=pltpu.PrefetchScalarGridSpec(
            num_scalar_prefetch=0,
            grid=grid,
            in_specs=[
                pl.BlockSpec((tm, D), lambda i: (i, 0)),
                pl.BlockSpec((1, D), lambda i: (0, 0)),
                pl.BlockSpec((1, D), lambda i: (0, 0)),
            ],
            out_specs=pl.BlockSpec((tm, D), lambda i: (i, 0)),
        ),
        compiler_params=pltpu.CompilerParams(
            dimension_semantics=("parallel",),
            vmem_limit_bytes=vmem_limit),
        cost_estimate=cost,
    )(x2d, g2d, b2d)


def _dropout_residual_2d(x2d, y2d, bits, *, p, add_residual, vmem_limit):
    M, D = x2d.shape
    itemsize = jnp.dtype(x2d.dtype).itemsize
    has_bits = bits is not None
    live = 2 * (2 + (1 if has_bits else 0) + 1)    # double-buffered in + out tiles
    tm = _pick_tm(M, D, x2d.dtype, live_tiles=live, vmem_limit=vmem_limit)
    grid = (pl.cdiv(M, tm),)
    in_specs = [pl.BlockSpec((tm, D), lambda i: (i, 0)),
                pl.BlockSpec((tm, D), lambda i: (i, 0))]
    args = [x2d, y2d]
    bytes_accessed = itemsize * 3 * M * D
    if has_bits:
        in_specs.append(pl.BlockSpec((tm, D), lambda i: (i, 0)))
        args.append(bits)
        bytes_accessed += 4 * M * D
    cost = pl.CostEstimate(flops=3 * M * D, transcendentals=0,
                           bytes_accessed=bytes_accessed)
    return pl.pallas_call(
        functools.partial(_dropout_residual_kernel,
                          threshold=_dropout_threshold(p),
                          inv_keep=(1.0 / (1.0 - float(p)) if p < 1.0 else 0.0),
                          add_residual=bool(add_residual),
                          has_bits=has_bits),
        out_shape=jax.ShapeDtypeStruct((M, D), x2d.dtype),
        grid_spec=pltpu.PrefetchScalarGridSpec(
            num_scalar_prefetch=0, grid=grid,
            in_specs=in_specs,
            out_specs=pl.BlockSpec((tm, D), lambda i: (i, 0)),
        ),
        compiler_params=pltpu.CompilerParams(
            dimension_semantics=("parallel",),
            vmem_limit_bytes=vmem_limit),
        cost_estimate=cost,
    )(*args)


def residual_connection_forward(x, gamma, beta, sublayer, *,
                                prob_dropout=0.1, add_sublayer=True,
                                training=False, dropout_key=None, eps=1e-5):
    """Generic path: Pallas LN -> arbitrary XLA sublayer -> Pallas dropout+add."""
    D = x.shape[-1]
    lead = x.shape[:-1]
    x2d = x.reshape(-1, D)
    M = x2d.shape[0]
    vmem_limit = _vmem_limit_bytes()

    # 1) pre-norm (Pallas kernel)
    normed = _layernorm_2d(x2d, gamma, beta, eps=eps, vmem_limit=vmem_limit)

    # 2) arbitrary sublayer callable runs as plain XLA between the two kernels.
    # TODO(synk): a generic Python `sublayer` cannot be fused into a fixed Pallas
    # kernel; use residual_connection_forward_fused() for the matmul/FFN case.
    sub_out = sublayer(normed.reshape(*lead, D)).reshape(-1, D).astype(x2d.dtype)

    # 3) dropout (+ residual add) fused in one Pallas kernel.
    has_bits = bool(training) and prob_dropout > 0.0
    bits = None
    if has_bits:
        if dropout_key is None:
            dropout_key = jax.random.PRNGKey(0)
        # TODO(synk): in-kernel pltpu.prng_random_bits would save this uint32 HBM
        # pass but has no CPU/interpret lowering; precomputed bits also make the
        # dropout mask independent of the tile size.
        bits = jax.random.bits(dropout_key, (M, D), dtype=jnp.uint32)

    if not has_bits and not add_sublayer:
        out2d = sub_out                      # identity dropout, no residual
    else:
        out2d = _dropout_residual_2d(x2d, sub_out, bits, p=prob_dropout,
                                     add_residual=add_sublayer,
                                     vmem_limit=vmem_limit)
    return out2d.reshape(*lead, D)


def residual_connection_forward_fused(x, gamma, beta, w_sub, b_sub, *,
                                      activation=jnp.tanh, prob_dropout=0.1,
                                      add_sublayer=True, training=False,
                                      dropout_key=None, eps=1e-5):
    """Fused fast path for sublayer(z) = activation(z @ W + b): one pallas_call."""
    D = x.shape[-1]
    lead = x.shape[:-1]
    x2d = x.reshape(-1, D)
    M = x2d.shape[0]
    itemsize = jnp.dtype(x2d.dtype).itemsize
    vmem_limit = _vmem_limit_bytes()

    has_bits = bool(training) and prob_dropout > 0.0
    bits = None
    if has_bits:
        if dropout_key is None:
            dropout_key = jax.random.PRNGKey(0)
        bits = jax.random.bits(dropout_key, (M, D), dtype=jnp.uint32)

    # TODO(synk): weight is kept fully resident in VMEM (no K-tiling); fine for
    # moderate dim_model, would need a K-tiled accumulator for very large D.
    w_bytes = 2 * D * D * jnp.dtype(w_sub.dtype).itemsize + 8 * D * itemsize
    live = 2 * (1 + (1 if has_bits else 0) + 1)
    tm = _pick_tm(M, D, x2d.dtype, live_tiles=live, vmem_limit=vmem_limit,
                  reserved_bytes=w_bytes)
    grid = (pl.cdiv(M, tm),)

    g2d = gamma.reshape(1, D)
    be2d = beta.reshape(1, D)
    wb2d = b_sub.reshape(1, D)
    in_specs = [
        pl.BlockSpec((tm, D), lambda i: (i, 0)),
        pl.BlockSpec((1, D), lambda i: (0, 0)),
        pl.BlockSpec((1, D), lambda i: (0, 0)),
        pl.BlockSpec((D, D), lambda i: (0, 0)),    # weight resident across steps
        pl.BlockSpec((1, D), lambda i: (0, 0)),
    ]
    args = [x2d, g2d, be2d, w_sub, wb2d]
    if has_bits:
        in_specs.append(pl.BlockSpec((tm, D), lambda i: (i, 0)))
        args.append(bits)

    cost = pl.CostEstimate(
        flops=2 * M * D * D + 12 * M * D,
        transcendentals=M * D + M,
        bytes_accessed=itemsize * (2 * M * D + D * D + 3 * D)
        + (4 * M * D if has_bits else 0))

    out = pl.pallas_call(
        functools.partial(_fused_ln_sublayer_kernel, eps=float(eps),
                          threshold=_dropout_threshold(prob_dropout),
                          inv_keep=(1.0 / (1.0 - float(prob_dropout))
                                    if prob_dropout < 1.0 else 0.0),
                          add_residual=bool(add_sublayer),
                          has_bits=has_bits, activation=activation),
        out_shape=jax.ShapeDtypeStruct((M, D), x2d.dtype),
        grid_spec=pltpu.PrefetchScalarGridSpec(
            num_scalar_prefetch=0, grid=grid,
            in_specs=in_specs,
            out_specs=pl.BlockSpec((tm, D), lambda i: (i, 0)),
        ),
        compiler_params=pltpu.CompilerParams(
            dimension_semantics=("parallel",),
            vmem_limit_bytes=vmem_limit),
        cost_estimate=cost,
    )(*args)
    return out.reshape(*lead, D)


# ------------------------------------------------------------------ demo / check


if __name__ == "__main__":
    # Match f32 matmul precision between the Pallas MXU dot and the XLA reference.
    jax.config.update("jax_default_matmul_precision", "highest")

    # x is (batch, seq, dim_model); dim_model = 128 keeps the output lane-dense.
    batch, seq, dim_model = 2, 8, 128

    key = jax.random.PRNGKey(0)
    kx, kg, kb, kw, kbb, kdrop = jax.random.split(key, 6)

    x = jax.random.normal(kx, (batch, seq, dim_model), dtype=jnp.float32)
    gamma = (jnp.ones((dim_model,), jnp.float32)
             + 0.1 * jax.random.normal(kg, (dim_model,), dtype=jnp.float32))
    beta = 0.1 * jax.random.normal(kb, (dim_model,), dtype=jnp.float32)

    # Deterministic example sublayer (stands in for attention / FFN).
    w_sub = jax.random.normal(kw, (dim_model, dim_model),
                              dtype=jnp.float32) / math.sqrt(dim_model)
    b_sub = 0.1 * jax.random.normal(kbb, (dim_model,), dtype=jnp.float32)
    sublayer = lambda z: jnp.tanh(z @ w_sub + b_sub)

    # Pure-JAX reference (eval mode: dropout = identity).
    xf = x.astype(jnp.float32)
    mean = xf.mean(-1, keepdims=True)
    var = ((xf - mean) ** 2).mean(-1, keepdims=True)
    normed_ref = (xf - mean) / jnp.sqrt(var + 1e-5) * gamma + beta
    ref = x + sublayer(normed_ref)

    # 1) Generic path, eval mode.
    out = residual_connection_forward(x, gamma, beta, sublayer,
                                      prob_dropout=0.1, add_sublayer=True,
                                      training=False)
    out = jax.block_until_ready(out)
    assert out.shape == x.shape
    assert jnp.allclose(out, ref, atol=1e-4, rtol=1e-4)

    # 2) Fused fast path (LN + MXU matmul + tanh + residual in one kernel), eval.
    out_fused = residual_connection_forward_fused(
        x, gamma, beta, w_sub, b_sub, activation=jnp.tanh,
        prob_dropout=0.1, add_sublayer=True, training=False)
    out_fused = jax.block_until_ready(out_fused)
    assert out_fused.shape == x.shape
    assert jnp.allclose(out_fused, ref, atol=2e-3, rtol=2e-3)

    # 3) Generic path, training mode: each element of (out - x) must be either
    #    ~0 (dropped) or ~sublayer(norm(x)) / (1 - p) (kept).
    p = 0.1
    out_tr = residual_connection_forward(x, gamma, beta, sublayer,
                                         prob_dropout=p, add_sublayer=True,
                                         training=True, dropout_key=kdrop)
    out_tr = jax.block_until_ready(out_tr)
    assert out_tr.shape == x.shape
    diff = out_tr - x
    kept_val = sublayer(normed_ref) / (1.0 - p)
    consistent = jnp.minimum(jnp.abs(diff), jnp.abs(diff - kept_val)) < 1e-3
    assert bool(jnp.all(consistent))

    print("KERNEL_OK")
</pallas_src>

<mosaic_0001>
module attributes {stable_mosaic.version = 11 : i64} {
  func.func @_layernorm_kernel(%arg0: i32, %arg1: memref<16x128xf32, #tpu.memory_space<vmem>>, %arg2: memref<1x128xf32, #tpu.memory_space<vmem>>, %arg3: memref<1x128xf32, #tpu.memory_space<vmem>>, %arg4: memref<16x128xf32, #tpu.memory_space<vmem>>) attributes {dimension_semantics = [#tpu.dimension_semantics<parallel>], iteration_bounds = array<i64: 1>, scalar_prefetch = 0 : i64, scratch_operands = 0 : i64, tpu.core_type = #tpu.core_type<tc>, window_params = [{transform_indices = @transform_0, window_bounds = array<i64: 16, 128>}, {pipeline_mode = #tpu.pipeline_mode<synchronous>, transform_indices = @transform_1, window_bounds = array<i64: 1, 128>}, {pipeline_mode = #tpu.pipeline_mode<synchronous>, transform_indices = @transform_2, window_bounds = array<i64: 1, 128>}, {transform_indices = @transform_3, window_bounds = array<i64: 16, 128>}]} {
    %c0 = arith.constant 0 : index
    %c0_0 = arith.constant 0 : index
    %0 = vector.load %arg1[%c0, %c0_0] : memref<16x128xf32, #tpu.memory_space<vmem>>, vector<16x128xf32>
    %cst = arith.constant dense<0.000000e+00> : vector<16xf32>
    %1 = vector.multi_reduction <add>, %0, %cst [1] : vector<16x128xf32> to vector<16xf32>
    %2 = vector.shape_cast %1 : vector<16xf32> to vector<16x1xf32>
    %3 = arith.mulf %0, %0 : vector<16x128xf32>
    %cst_1 = arith.constant dense<0.000000e+00> : vector<16xf32>
    %4 = vector.multi_reduction <add>, %3, %cst_1 [1] : vector<16x128xf32> to vector<16xf32>
    %5 = vector.shape_cast %4 : vector<16xf32> to vector<16x1xf32>
    %cst_2 = arith.constant 7.812500e-03 : f32
    %6 = vector.broadcast %cst_2 : f32 to vector<16x1xf32>
    %7 = arith.mulf %2, %6 : vector<16x1xf32>
    %cst_3 = arith.constant 7.812500e-03 : f32
    %8 = vector.broadcast %cst_3 : f32 to vector<16x1xf32>
    %9 = arith.mulf %5, %8 : vector<16x1xf32>
    %10 = arith.mulf %7, %7 : vector<16x1xf32>
    %11 = arith.subf %9, %10 : vector<16x1xf32>
    %cst_4 = arith.constant 9.99999974E-6 : f32
    %12 = vector.broadcast %cst_4 : f32 to vector<16x1xf32>
    %13 = arith.addf %11, %12 : vector<16x1xf32>
    %14 = math.rsqrt %13 : vector<16x1xf32>
    %c0_5 = arith.constant 0 : index
    %c0_6 = arith.constant 0 : index
    %15 = vector.load %arg2[%c0_5, %c0_6] : memref<1x128xf32, #tpu.memory_space<vmem>>, vector<1x128xf32>
    %16 = vector.broadcast %14 : vector<16x1xf32> to vector<16x128xf32>
    %17 = vector.broadcast %15 : vector<1x128xf32> to vector<16x128xf32>
    %18 = arith.mulf %16, %17 : vector<16x128xf32>
    %c0_7 = arith.constant 0 : index
    %c0_8 = arith.constant 0 : index
    %19 = vector.load %arg3[%c0_7, %c0_8] : memref<1x128xf32, #tpu.memory_space<vmem>>, vector<1x128xf32>
    %20 = vector.broadcast %7 : vector<16x1xf32> to vector<16x128xf32>
    %21 = arith.mulf %20, %18 : vector<16x128xf32>
    %22 = vector.broadcast %19 : vector<1x128xf32> to vector<16x128xf32>
    %23 = arith.subf %22, %21 : vector<16x128xf32>
    %24 = arith.mulf %0, %18 : vector<16x128xf32>
    %25 = arith.addf %24, %23 : vector<16x128xf32>
    %c0_9 = arith.constant 0 : index
    %c0_10 = arith.constant 0 : index
    %26 = vector.load %arg4[%c0_9, %c0_10] : memref<16x128xf32, #tpu.memory_space<vmem>>, vector<16x128xf32>
    tpu.vector_store %arg4[%c0_9, %c0_10], %25 {strides = array<i32>} : memref<16x128xf32, #tpu.memory_space<vmem>>, vector<16x128xf32>,
    return
  }
  func.func @transform_0(%arg0: i32) -> (i32, i32) {
    %c0_i32 = arith.constant 0 : i32
    %c0_i32_0 = arith.constant 0 : i32
    return %arg0, %c0_i32 : i32, i32
  }
  func.func @transform_1(%arg0: i32) -> (i32, i32) {
    %c0_i32 = arith.constant 0 : i32
    %c0_i32_0 = arith.constant 0 : i32
    %c0_i32_1 = arith.constant 0 : i32
    return %c0_i32, %c0_i32_0 : i32, i32
  }
  func.func @transform_2(%arg0: i32) -> (i32, i32) {
    %c0_i32 = arith.constant 0 : i32
    %c0_i32_0 = arith.constant 0 : i32
    %c0_i32_1 = arith.constant 0 : i32
    return %c0_i32, %c0_i32_0 : i32, i32
  }
  func.func @transform_3(%arg0: i32) -> (i32, i32) {
    %c0_i32 = arith.constant 0 : i32
    %c0_i32_0 = arith.constant 0 : i32
    return %arg0, %c0_i32 : i32, i32
  }
}

</mosaic_0001>

<llo_original>
// kernel: tpu_custom_call.1
$region0: #{tpu_custom_call.1}
  #allocation0 [shape = 'u32[]', space=smem, size = 0x4, offset = 0x4, fixed_abs, tag = 'smem constant byte address 0x4 - core index']
  #allocation1 [shape = 'u32[144,128]{1,0:T(1,128)}', space=vmem, size = 0x12000, scoped, tag = 'internal scratch']
  %s0 = inlined_call_operand.hbm [shape: f32[16,128], index: 0, kind: input, shape index: {}]
  %s1 = inlined_call_operand.hbm [shape: f32[1,128], index: 1, kind: input, shape index: {}]
  %s2 = inlined_call_operand.hbm [shape: f32[1,128], index: 2, kind: input, shape index: {}]
  %s3 = inlined_call_operand.hbm [shape: f32[16,128], index: 3, kind: output, shape index: {}]
  %s4 = sld [smem:[#allocation0]]
  $region34: #{tpu_custom_call.1} parent=0
    _
  %s6 = ssub.s32 1, %s4
  %s7 = scalar_select 0, %s6, %s4
  $region1: #{tpu_custom_call.1} parent=0
    #allocation2 [shape = 'u8[8192]{0}', space=vmem, size = 0x2000, scoped, tag = 'input window, operand 0, single buffered']
    #allocation3 [shape = 's32[1]{0}', space=sflag, size = 0x4, scoped, tag = 'scoped memory for tpu_custom_call.1']
    #allocation4 [shape = 's32[1]{0}', space=sflag, size = 0x4, scoped, tag = 'scoped memory for tpu_custom_call.1']
    #allocation5 [shape = 'u8[512]{0}', space=vmem, size = 0x400, scoped, tag = 'input window, operand 1, single buffered']
    #allocation6 [shape = 's32[1]{0}', space=sflag, size = 0x4, scoped, tag = 'scoped memory for tpu_custom_call.1']
    #allocation7 [shape = 'u8[512]{0}', space=vmem, size = 0x400, scoped, tag = 'input window, operand 2, single buffered']
    #allocation8 [shape = 'u8[8192]{0}', space=vmem, size = 0x2000, scoped, tag = 'output window, operand 0, single buffered']
    %8 = vsyncpa [#allocation3], 0
    %9 = vsyncpa [#allocation6], 0
    %10 = vsyncpa [#allocation4], 0
    // Predicated region
    $region2: #{tpu_custom_call.1} parent=1 // pred_check
      _
    $region3: #{tpu_custom_call.1} parent=1 // pred_check_branch
      %12 = sbr.rel (0) target = $region5
    $region4: #{tpu_custom_call.1} parent=1 // pred_region
      %s14 = ssub.s32 256, 256
      %15 = vsyncadd [#allocation3], %s14
      %s16 = sshll.u32 [#allocation2], 4
      %s17 = int_to_ptr.vmem [resolvable:$true] %s16
      %22 = dma.hbm_to_vmem [thread:$0]  %s0, 256, %s17, [#allocation3], 128, 128, 8
    $region5: #{tpu_custom_call.1} parent=1 // pred_fallthru
      _
    // Predicated region
    $region6: #{tpu_custom_call.1} parent=1 // pred_check
      _
    $region7: #{tpu_custom_call.1} parent=1 // pred_check_branch
      %24 = sbr.rel (0) target = $region9
    $region8: #{tpu_custom_call.1} parent=1 // pred_region
      %s26 = ssub.s32 16, 16
      %27 = vsyncadd [#allocation6], %s26
      %s29 = sshll.u32 [#allocation5], 4
      %s30 = int_to_ptr.vmem [resolvable:$true] %s29
      %32 = dma.hbm_to_vmem [thread:$0]  %s1, 16, %s30, [#allocation6]
    $region9: #{tpu_custom_call.1} parent=1 // pred_fallthru
      _
    // Predicated region
    $region10: #{tpu_custom_call.1} parent=1 // pred_check
      _
    $region11: #{tpu_custom_call.1} parent=1 // pred_check_branch
      %34 = sbr.rel (0) target = $region13
    $region12: #{tpu_custom_call.1} parent=1 // pred_region
      %s36 = ssub.s32 16, 16
      %37 = vsyncadd [#allocation6], %s36
      %s39 = sshll.u32 [#allocation7], 4
      %s40 = int_to_ptr.vmem [resolvable:$true] %s39
      %42 = dma.hbm_to_vmem [thread:$0]  %s2, 16, %s40, [#allocation6]
    $region13: #{tpu_custom_call.1} parent=1 // pred_fallthru
      _
    // Predicated region
    $region14: #{tpu_custom_call.1} parent=1 // pred_check
      _
    $region15: #{tpu_custom_call.1} parent=1 // pred_check_branch
      %44 = sbr.rel (0) target = $region17
    $region16: #{tpu_custom_call.1} parent=1 // pred_region
      %45 = dma.done [#allocation3], 256
    $region17: #{tpu_custom_call.1} parent=1 // pred_fallthru
      _
    // Predicated region
    $region18: #{tpu_custom_call.1} parent=1 // pred_check
      _
    $region19: #{tpu_custom_call.1} parent=1 // pred_check_branch
      %47 = sbr.rel (0) target = $region21
    $region20: #{tpu_custom_call.1} parent=1 // pred_region
      %48 = dma.done [#allocation6], 16
    $region21: #{tpu_custom_call.1} parent=1 // pred_fallthru
      _
    // Predicated region
    $region22: #{tpu_custom_call.1} parent=1 // pred_check
      _
    $region23: #{tpu_custom_call.1} parent=1 // pred_check_branch
      %50 = sbr.rel (0) target = $region25
    $region24: #{tpu_custom_call.1} parent=1 // pred_region
      %51 = dma.done [#allocation6], 16
    $region25: #{tpu_custom_call.1} parent=1 // pred_fallthru
      _
    %v52 = vld [vmem:[#allocation2] sm:$0xff]
    %v53 = vld [vmem:[#allocation2 + $0x8] sm:$0xff]
    %54 = vadd.xlane.f32.xlu0 %v52
    %v55 = vpop.xlane.xlu0 %54
    %56 = vadd.xlane.f32.xlu0 %v53
    %v57 = vpop.xlane.xlu0 %56
    %v58 = vmul.f32 %v52, %v52
    %v59 = vmul.f32 %v53, %v53
    %60 = vadd.xlane.f32.xlu0 %v58
    %v61 = vpop.xlane.xlu0 %60
    %62 = vadd.xlane.f32.xlu0 %v59
    %v63 = vpop.xlane.xlu0 %62
    %v64 = vmul.f32 %v55, 0.0078125
    %v65 = vmul.f32 %v57, 0.0078125
    %v66 = vmul.f32 %v61, 0.0078125
    %v67 = vmul.f32 %v63, 0.0078125
    %v68 = vmul.f32 %v64, %v64
    %v69 = vmul.f32 %v65, %v65
    %v70 = vsub.f32 %v66, %v68
    %v71 = vsub.f32 %v67, %v69
    %v72 = vadd.f32 %v70, 1e-05
    %v73 = vadd.f32 %v71, 1e-05
    %v74 = vrsqrt.pop %v72
    %v75 = vrsqrt.pop %v73
    %v76 = vld [vmem:[#allocation5] sm:$0x1]
    %v78 = vlaneseq
    %v79 = vshrl.u32 %v78, 7
    %v80 = vsub.s32 0, %v79
    %v81 = vrot.slane %v76, %v80
    %v83 = vmul.f32 %v74, %v81
    %v84 = vmul.f32 %v75, %v81
    %v85 = vld [vmem:[#allocation7] sm:$0x1]
    %v86 = vmul.f32 %v64, %v83
    %v87 = vmul.f32 %v65, %v84
    %v89 = vlaneseq
    %v90 = vshrl.u32 %v89, 7
    %v91 = vsub.s32 0, %v90
    %v92 = vrot.slane %v85, %v91
    %v94 = vsub.f32 %v92, %v86
    %v95 = vsub.f32 %v92, %v87
    %v96 = vmul.f32 %v52, %v83
    %v97 = vmul.f32 %v53, %v84
    %v98 = vadd.f32 %v96, %v94
    %v99 = vadd.f32 %v97, %v95
    %100 = vst [vmem:[#allocation8] sm:$0xff] %v98
    %101 = vst [vmem:[#allocation8 + $0x8] sm:$0xff] %v99
    // Predicated region
    $region26: #{tpu_custom_call.1} parent=1 // pred_check
      _
    $region27: #{tpu_custom_call.1} parent=1 // pred_check_branch
      %103 = sbr.rel (0) target = $region29
    $region28: #{tpu_custom_call.1} parent=1 // pred_region
      %s105 = ssub.s32 256, 256
      %106 = vsyncadd [#allocation4], %s105
      %s107 = sshll.u32 [#allocation8], 4
      %s108 = int_to_ptr.vmem [resolvable:$true] %s107
      %113 = dma.vmem_to_hbm [thread:$0]  %s108, 256, %s3, [#allocation4], 128, 128, 8
    $region29: #{tpu_custom_call.1} parent=1 // pred_fallthru
      _
    // Predicated region
    $region30: #{tpu_custom_call.1} parent=1 // pred_check
      _
    $region31: #{tpu_custom_call.1} parent=1 // pred_check_branch
      %115 = sbr.rel (0) target = $region33
    $region32: #{tpu_custom_call.1} parent=1 // pred_region
      %116 = dma.done [#allocation4], 256
    $region33: #{tpu_custom_call.1} parent=1 // pred_fallthru
      _
    %117 = vsyncpa [#allocation3], 1
    %118 = vsyncpa [#allocation6], 1
    %119 = vsyncpa [#allocation4], 1

</llo_original>
